<compile_context>
chip_gen: v7x
topology: tpu7x:2x2x1
jax: 0.10.0
libtpu: 0.0.40
codegen_flags: <defaults>
</compile_context>

<pallas_src>
import functools

import jax
import jax.numpy as jnp
from jax.experimental import pallas as pl
from jax.experimental.pallas import tpu as pltpu

EPS = 1e-05
# Comfortable everywhere: v5e/v6e have 128 MiB physical VMEM (16/32 MiB scoped
# default), v7x has 64 MiB physical.  Worst-case usage below is ~16-20 MiB.
_VMEM_LIMIT_BYTES = 40 * 1024 * 1024


# ---------------------------------------------------------------------------
# Tile selection helpers (trace time).
# ---------------------------------------------------------------------------
def _choose_fused_f_tile(N, F, x_bytes_cap=2 * 1024 * 1024):
    """Widest lane-dense feature tile s.t. one (N, f_tile) f32 slab of x fits
    under x_bytes_cap.  Returns None when the batch is too large for the
    fused (single-HBM-read) path."""
    max_cols = x_bytes_cap // (4 * max(N, 1))
    if F <= max_cols:
        return F
    f_tile = (max_cols // 128) * 128
    return f_tile if f_tile >= 128 else None


def _choose_two_pass_tiles(N, F):
    """Feature / batch tile sizes for the two-pass (large-N) path."""
    if F > 1024:
        f_tile = 1024
    elif F >= 256 and F % 128 == 0:
        # >=2 feature tiles so pass 1's parallel axis can shard across both
        # TensorCores on v7x (pass 2 already parallelizes over batch tiles).
        f_tile = max(128, (F // 2 // 128) * 128)
    else:
        f_tile = F
    n_tile = N if N <= 1024 else 1024
    return f_tile, n_tile


# ---------------------------------------------------------------------------
# Fused single-pass kernel: grid over feature tiles only, batch resident.
# HBM traffic = read x once + write out once (plus tiny (1,F) vectors).
# ---------------------------------------------------------------------------
def _fused_kernel(x_ref, w_ref, b_ref, rm_ref, rv_ref,
                  out_ref, new_rm_ref, new_rv_ref, *, n_total, momentum):
    x = x_ref[...].astype(jnp.float32)
    inv_n = 1.0 / n_total
    mean = jnp.sum(x, axis=0, keepdims=True) * inv_n
    ex2 = jnp.sum(x * x, axis=0, keepdims=True) * inv_n
    var = jnp.maximum(ex2 - mean * mean, 0.0)           # biased variance
    inv_std = jax.lax.rsqrt(var + EPS)
    scale = inv_std * w_ref[...].astype(jnp.float32)
    shift = b_ref[...].astype(jnp.float32) - mean * scale
    out_ref[...] = (x * scale + shift).astype(out_ref.dtype)
    new_rm_ref[...] = ((1.0 - momentum) * rm_ref[...].astype(jnp.float32)
                       + momentum * mean).astype(new_rm_ref.dtype)
    new_rv_ref[...] = ((1.0 - momentum) * rv_ref[...].astype(jnp.float32)
                       + momentum * var).astype(new_rv_ref.dtype)


# ---------------------------------------------------------------------------
# Two-pass path, pass 1: batch-axis reduction with resident accumulators.
# scale_ref / shift_ref double as f32 accumulators (sum, sum of squares);
# on the last batch step they are finalized into the fused affine vectors
# scale = rsqrt(var+eps)*w, shift = b - mean*scale, and the running-stat EMA
# is emitted directly (new_rm / new_rv outputs).
# ---------------------------------------------------------------------------
def _stats_kernel(x_ref, w_ref, b_ref, rm_ref, rv_ref,
                  new_rm_ref, new_rv_ref, scale_ref, shift_ref,
                  *, n_total, n_tile, momentum, mask_tail):
    n_idx = pl.program_id(1)
    last = pl.num_programs(1) - 1

    @pl.when(n_idx == 0)
    def _init():
        scale_ref[...] = jnp.zeros_like(scale_ref)   # running sum(x)
        shift_ref[...] = jnp.zeros_like(shift_ref)   # running sum(x*x)

    def _accumulate(x):
        scale_ref[...] += jnp.sum(x, axis=0, keepdims=True)
        shift_ref[...] += jnp.sum(x * x, axis=0, keepdims=True)

    if mask_tail:
        # Only the final batch tile has padded rows: only it pays for the
        # iota/compare/select masking.
        @pl.when(n_idx != last)
        def _full_tile():
            _accumulate(x_ref[...].astype(jnp.float32))

        @pl.when(n_idx == last)
        def _tail_tile():
            x = x_ref[...].astype(jnp.float32)
            row = (jax.lax.broadcasted_iota(jnp.int32, x.shape, 0)
                   + n_idx * n_tile)
            _accumulate(jnp.where(row < n_total, x, 0.0))
    else:
        _accumulate(x_ref[...].astype(jnp.float32))

    @pl.when(n_idx == last)
    def _finalize():
        inv_n = 1.0 / n_total
        mean = scale_ref[...] * inv_n
        ex2 = shift_ref[...] * inv_n
        # Biased variance (torch var(unbiased=False)).
        var = jnp.maximum(ex2 - mean * mean, 0.0)
        new_rm_ref[...] = ((1.0 - momentum) * rm_ref[...].astype(jnp.float32)
                           + momentum * mean).astype(new_rm_ref.dtype)
        new_rv_ref[...] = ((1.0 - momentum) * rv_ref[...].astype(jnp.float32)
                           + momentum * var).astype(new_rv_ref.dtype)
        inv_std = jax.lax.rsqrt(var + EPS)
        scale = inv_std * w_ref[...].astype(jnp.float32)
        shift = b_ref[...].astype(jnp.float32) - mean * scale
        scale_ref[...] = scale
        shift_ref[...] = shift


# ---------------------------------------------------------------------------
# Two-pass path, pass 2: fully parallel fused normalize + affine.
# ---------------------------------------------------------------------------
def _norm_kernel(x_ref, scale_ref, shift_ref, out_ref):
    x = x_ref[...].astype(jnp.float32)
    out_ref[...] = (x * scale_ref[...] + shift_ref[...]).astype(out_ref.dtype)


# ---------------------------------------------------------------------------
# Wrapper.
# ---------------------------------------------------------------------------
@functools.partial(
    jax.jit,
    static_argnames=("n_heads", "momentum", "_force_two_pass", "_force_n_tile"))
def multi_head_batch_norm(x, weight, bias, running_mean, running_var, *,
                          n_heads, momentum=0.1,
                          _force_two_pass=False, _force_n_tile=None):
    """Training-mode forward of MultiHeadBatchNorm.

    x:            (N, in_feats)
    weight, bias: (n_heads, in_feats // n_heads)
    running_*:    (n_heads, in_feats // n_heads)

    Returns (out, new_running_mean, new_running_var) with
    out shape (N, n_heads, in_feats // n_heads).
    """
    N, F = x.shape
    assert F % n_heads == 0
    d = F // n_heads

    w_flat = weight.reshape(1, F)
    b_flat = bias.reshape(1, F)
    rm_flat = running_mean.reshape(1, F)
    rv_flat = running_var.reshape(1, F)

    fused_f_tile = None if _force_two_pass else _choose_fused_f_tile(N, F)

    if fused_f_tile is not None:
        # ---- Fused single-pass: batch resident per feature tile ----------
        nf = pl.cdiv(F, fused_f_tile)
        vec_spec = pl.BlockSpec((1, fused_f_tile), lambda f: (0, f))
        x_spec = pl.BlockSpec((N, fused_f_tile), lambda f: (0, f))

        out, new_rm, new_rv = pl.pallas_call(
            functools.partial(_fused_kernel, n_total=N, momentum=momentum),
            out_shape=(
                jax.ShapeDtypeStruct((N, F), x.dtype),
                jax.ShapeDtypeStruct((1, F), running_mean.dtype),
                jax.ShapeDtypeStruct((1, F), running_var.dtype),
            ),
            grid_spec=pltpu.PrefetchScalarGridSpec(
                num_scalar_prefetch=0,
                grid=(nf,),
                in_specs=[x_spec, vec_spec, vec_spec, vec_spec, vec_spec],
                out_specs=[x_spec, vec_spec, vec_spec],
            ),
            compiler_params=pltpu.CompilerParams(
                dimension_semantics=("parallel",),
                vmem_limit_bytes=_VMEM_LIMIT_BYTES),
        )(x, w_flat, b_flat, rm_flat, rv_flat)
    else:
        # ---- Two-pass: stats reduction, then parallel normalize ----------
        f_tile, n_tile = _choose_two_pass_tiles(N, F)
        if _force_n_tile is not None:
            n_tile = _force_n_tile
        nf = pl.cdiv(F, f_tile)
        nn = pl.cdiv(N, n_tile)
        mask_tail = (N % n_tile) != 0

        vec_spec = pl.BlockSpec((1, f_tile), lambda f, n: (0, f))
        x_spec = pl.BlockSpec((n_tile, f_tile), lambda f, n: (n, f))

        stats_kernel = functools.partial(
            _stats_kernel, n_total=N, n_tile=n_tile, momentum=momentum,
            mask_tail=mask_tail)

        # Pass 1: per-column batch stats + fused affine vectors + EMA.
        new_rm, new_rv, scale, shift = pl.pallas_call(
            stats_kernel,
            out_shape=(
                jax.ShapeDtypeStruct((1, F), running_mean.dtype),
                jax.ShapeDtypeStruct((1, F), running_var.dtype),
                jax.ShapeDtypeStruct((1, F), jnp.float32),
                jax.ShapeDtypeStruct((1, F), jnp.float32),
            ),
            grid_spec=pltpu.PrefetchScalarGridSpec(
                num_scalar_prefetch=0,
                grid=(nf, nn),
                in_specs=[x_spec, vec_spec, vec_spec, vec_spec, vec_spec],
                out_specs=[vec_spec, vec_spec, vec_spec, vec_spec],
            ),
            compiler_params=pltpu.CompilerParams(
                dimension_semantics=("parallel", "arbitrary"),
                vmem_limit_bytes=_VMEM_LIMIT_BYTES),
        )(x, w_flat, b_flat, rm_flat, rv_flat)

        # Pass 2: out = x * scale + shift (fully parallel, lane-dense stores).
        out = pl.pallas_call(
            _norm_kernel,
            out_shape=jax.ShapeDtypeStruct((N, F), x.dtype),
            grid_spec=pltpu.PrefetchScalarGridSpec(
                num_scalar_prefetch=0,
                grid=(nf, nn),
                in_specs=[x_spec, vec_spec, vec_spec],
                out_specs=x_spec,
            ),
            compiler_params=pltpu.CompilerParams(
                dimension_semantics=("parallel", "parallel"),
                vmem_limit_bytes=_VMEM_LIMIT_BYTES),
        )(x, scale, shift)

    return (out.reshape(N, n_heads, d),
            new_rm.reshape(n_heads, d),
            new_rv.reshape(n_heads, d))


# ---------------------------------------------------------------------------
# Pure-JAX reference and self-test.
# ---------------------------------------------------------------------------
def _reference(x, weight, bias, running_mean, running_var, n_heads,
               momentum=0.1):
    N, F = x.shape
    d = F // n_heads
    xv = x.reshape(N, n_heads, d).astype(jnp.float32)
    mean = xv.mean(axis=0, keepdims=True)
    var = ((xv - mean) ** 2).mean(axis=0, keepdims=True)
    out = (xv - mean) * jax.lax.rsqrt(var + EPS)
    out = out * weight + bias
    new_rm = (1.0 - momentum) * running_mean + momentum * mean[0]
    new_rv = (1.0 - momentum) * running_var + momentum * var[0]
    return out, new_rm, new_rv


def _check(x, weight, bias, running_mean, running_var, n_heads, **kwargs):
    out, new_rm, new_rv = multi_head_batch_norm(
        x, weight, bias, running_mean, running_var,
        n_heads=n_heads, momentum=0.1, **kwargs)
    out = jax.block_until_ready(out)
    new_rm = jax.block_until_ready(new_rm)
    new_rv = jax.block_until_ready(new_rv)

    ref_out, ref_rm, ref_rv = _reference(
        x, weight, bias, running_mean, running_var, n_heads, momentum=0.1)

    N, F = x.shape
    d = F // n_heads
    assert out.shape == (N, n_heads, d)
    assert jnp.allclose(out, ref_out, atol=1e-5, rtol=1e-5)
    assert jnp.allclose(new_rm, ref_rm, atol=1e-5, rtol=1e-5)
    assert jnp.allclose(new_rv, ref_rv, atol=1e-5, rtol=1e-5)


if __name__ == "__main__":
    key = jax.random.PRNGKey(0)
    kx, kw, kb, kx2 = jax.random.split(key, 4)

    n_heads = 4
    in_feats = 128             # d = 32; lane-dense (F multiple of 128)
    d = in_feats // n_heads

    weight = 1.0 + 0.1 * jax.random.normal(kw, (n_heads, d), dtype=jnp.float32)
    bias = 0.1 * jax.random.normal(kb, (n_heads, d), dtype=jnp.float32)
    running_mean = jnp.zeros((n_heads, d), dtype=jnp.float32)
    running_var = jnp.ones((n_heads, d), dtype=jnp.float32)

    # 1) Fused single-pass path (small batch fits in VMEM).
    x = jax.random.normal(kx, (16, in_feats), dtype=jnp.float32)
    _check(x, weight, bias, running_mean, running_var, n_heads)

    # 2) Two-pass path (forced), with a batch tail that exercises masking.
    x2 = jax.random.normal(kx2, (20, in_feats), dtype=jnp.float32)
    _check(x2, weight, bias, running_mean, running_var, n_heads,
           _force_two_pass=True, _force_n_tile=8)

    print("KERNEL_OK")
</pallas_src>

<mosaic_0001>
module attributes {stable_mosaic.version = 11 : i64} {
  func.func @_fused_kernel(%arg0: i32, %arg1: memref<16x128xf32, #tpu.memory_space<vmem>>, %arg2: memref<1x128xf32, #tpu.memory_space<vmem>>, %arg3: memref<1x128xf32, #tpu.memory_space<vmem>>, %arg4: memref<1x128xf32, #tpu.memory_space<vmem>>, %arg5: memref<1x128xf32, #tpu.memory_space<vmem>>, %arg6: memref<16x128xf32, #tpu.memory_space<vmem>>, %arg7: memref<1x128xf32, #tpu.memory_space<vmem>>, %arg8: memref<1x128xf32, #tpu.memory_space<vmem>>) attributes {dimension_semantics = [#tpu.dimension_semantics<parallel>], iteration_bounds = array<i64: 1>, scalar_prefetch = 0 : i64, scratch_operands = 0 : i64, tpu.core_type = #tpu.core_type<tc>, window_params = [{transform_indices = @transform_0, window_bounds = array<i64: 16, 128>}, {transform_indices = @transform_1, window_bounds = array<i64: 1, 128>}, {transform_indices = @transform_2, window_bounds = array<i64: 1, 128>}, {transform_indices = @transform_3, window_bounds = array<i64: 1, 128>}, {transform_indices = @transform_4, window_bounds = array<i64: 1, 128>}, {transform_indices = @transform_5, window_bounds = array<i64: 16, 128>}, {transform_indices = @transform_6, window_bounds = array<i64: 1, 128>}, {transform_indices = @transform_7, window_bounds = array<i64: 1, 128>}]} {
    %c0 = arith.constant 0 : index
    %c0_0 = arith.constant 0 : index
    %0 = vector.load %arg1[%c0, %c0_0] : memref<16x128xf32, #tpu.memory_space<vmem>>, vector<16x128xf32>
    %cst = arith.constant dense<0.000000e+00> : vector<128xf32>
    %1 = vector.multi_reduction <add>, %0, %cst [0] : vector<16x128xf32> to vector<128xf32>
    %2 = vector.shape_cast %1 : vector<128xf32> to vector<1x128xf32>
    %cst_1 = arith.constant 6.250000e-02 : f32
    %3 = vector.broadcast %cst_1 : f32 to vector<1x128xf32>
    %4 = arith.mulf %2, %3 : vector<1x128xf32>
    %5 = arith.mulf %0, %0 : vector<16x128xf32>
    %cst_2 = arith.constant dense<0.000000e+00> : vector<128xf32>
    %6 = vector.multi_reduction <add>, %5, %cst_2 [0] : vector<16x128xf32> to vector<128xf32>
    %7 = vector.shape_cast %6 : vector<128xf32> to vector<1x128xf32>
    %cst_3 = arith.constant 6.250000e-02 : f32
    %8 = vector.broadcast %cst_3 : f32 to vector<1x128xf32>
    %9 = arith.mulf %7, %8 : vector<1x128xf32>
    %10 = arith.mulf %4, %4 : vector<1x128xf32>
    %11 = arith.subf %9, %10 : vector<1x128xf32>
    %cst_4 = arith.constant 0.000000e+00 : f32
    %12 = vector.broadcast %cst_4 : f32 to vector<1x128xf32>
    %13 = arith.maximumf %11, %12 : vector<1x128xf32>
    %cst_5 = arith.constant 9.99999974E-6 : f32
    %14 = vector.broadcast %cst_5 : f32 to vector<1x128xf32>
    %15 = arith.addf %13, %14 : vector<1x128xf32>
    %16 = math.rsqrt %15 : vector<1x128xf32>
    %c0_6 = arith.constant 0 : index
    %c0_7 = arith.constant 0 : index
    %17 = vector.load %arg2[%c0_6, %c0_7] : memref<1x128xf32, #tpu.memory_space<vmem>>, vector<1x128xf32>
    %18 = arith.mulf %16, %17 : vector<1x128xf32>
    %c0_8 = arith.constant 0 : index
    %c0_9 = arith.constant 0 : index
    %19 = vector.load %arg3[%c0_8, %c0_9] : memref<1x128xf32, #tpu.memory_space<vmem>>, vector<1x128xf32>
    %20 = arith.mulf %4, %18 : vector<1x128xf32>
    %21 = arith.subf %19, %20 : vector<1x128xf32>
    %22 = vector.broadcast %18 : vector<1x128xf32> to vector<16x128xf32>
    %23 = arith.mulf %0, %22 : vector<16x128xf32>
    %24 = vector.broadcast %21 : vector<1x128xf32> to vector<16x128xf32>
    %25 = arith.addf %23, %24 : vector<16x128xf32>
    %c0_10 = arith.constant 0 : index
    %c0_11 = arith.constant 0 : index
    %26 = vector.load %arg6[%c0_10, %c0_11] : memref<16x128xf32, #tpu.memory_space<vmem>>, vector<16x128xf32>
    tpu.vector_store %arg6[%c0_10, %c0_11], %25 {strides = array<i32>} : memref<16x128xf32, #tpu.memory_space<vmem>>, vector<16x128xf32>,
    %c0_12 = arith.constant 0 : index
    %c0_13 = arith.constant 0 : index
    %27 = vector.load %arg4[%c0_12, %c0_13] : memref<1x128xf32, #tpu.memory_space<vmem>>, vector<1x128xf32>
    %cst_14 = arith.constant 0.899999976 : f32
    %28 = vector.broadcast %cst_14 : f32 to vector<1x128xf32>
    %29 = arith.mulf %28, %27 : vector<1x128xf32>
    %cst_15 = arith.constant 1.000000e-01 : f32
    %30 = vector.broadcast %cst_15 : f32 to vector<1x128xf32>
    %31 = arith.mulf %30, %4 : vector<1x128xf32>
    %32 = arith.addf %29, %31 : vector<1x128xf32>
    %c0_16 = arith.constant 0 : index
    %c0_17 = arith.constant 0 : index
    %33 = vector.load %arg7[%c0_16, %c0_17] : memref<1x128xf32, #tpu.memory_space<vmem>>, vector<1x128xf32>
    tpu.vector_store %arg7[%c0_16, %c0_17], %32 {strides = array<i32>} : memref<1x128xf32, #tpu.memory_space<vmem>>, vector<1x128xf32>,
    %c0_18 = arith.constant 0 : index
    %c0_19 = arith.constant 0 : index
    %34 = vector.load %arg5[%c0_18, %c0_19] : memref<1x128xf32, #tpu.memory_space<vmem>>, vector<1x128xf32>
    %cst_20 = arith.constant 0.899999976 : f32
    %35 = vector.broadcast %cst_20 : f32 to vector<1x128xf32>
    %36 = arith.mulf %35, %34 : vector<1x128xf32>
    %cst_21 = arith.constant 1.000000e-01 : f32
    %37 = vector.broadcast %cst_21 : f32 to vector<1x128xf32>
    %38 = arith.mulf %37, %13 : vector<1x128xf32>
    %39 = arith.addf %36, %38 : vector<1x128xf32>
    %c0_22 = arith.constant 0 : index
    %c0_23 = arith.constant 0 : index
    %40 = vector.load %arg8[%c0_22, %c0_23] : memref<1x128xf32, #tpu.memory_space<vmem>>, vector<1x128xf32>
    tpu.vector_store %arg8[%c0_22, %c0_23], %39 {strides = array<i32>} : memref<1x128xf32, #tpu.memory_space<vmem>>, vector<1x128xf32>,
    return
  }
  func.func @transform_0(%arg0: i32) -> (i32, i32) {
    %c0_i32 = arith.constant 0 : i32
    %c0_i32_0 = arith.constant 0 : i32
    return %c0_i32, %arg0 : i32, i32
  }
  func.func @transform_1(%arg0: i32) -> (i32, i32) {
    %c0_i32 = arith.constant 0 : i32
    %c0_i32_0 = arith.constant 0 : i32
    return %c0_i32, %arg0 : i32, i32
  }
  func.func @transform_2(%arg0: i32) -> (i32, i32) {
    %c0_i32 = arith.constant 0 : i32
    %c0_i32_0 = arith.constant 0 : i32
    return %c0_i32, %arg0 : i32, i32
  }
  func.func @transform_3(%arg0: i32) -> (i32, i32) {
    %c0_i32 = arith.constant 0 : i32
    %c0_i32_0 = arith.constant 0 : i32
    return %c0_i32, %arg0 : i32, i32
  }
  func.func @transform_4(%arg0: i32) -> (i32, i32) {
    %c0_i32 = arith.constant 0 : i32
    %c0_i32_0 = arith.constant 0 : i32
    return %c0_i32, %arg0 : i32, i32
  }
  func.func @transform_5(%arg0: i32) -> (i32, i32) {
    %c0_i32 = arith.constant 0 : i32
    %c0_i32_0 = arith.constant 0 : i32
    return %c0_i32, %arg0 : i32, i32
  }
  func.func @transform_6(%arg0: i32) -> (i32, i32) {
    %c0_i32 = arith.constant 0 : i32
    %c0_i32_0 = arith.constant 0 : i32
    return %c0_i32, %arg0 : i32, i32
  }
  func.func @transform_7(%arg0: i32) -> (i32, i32) {
    %c0_i32 = arith.constant 0 : i32
    %c0_i32_0 = arith.constant 0 : i32
    return %c0_i32, %arg0 : i32, i32
  }
}

</mosaic_0001>

<llo_original>
// kernel: multi_head_batch_norm.1
$region0: #{multi_head_batch_norm.1}
  #allocation0 [shape = 'u32[]', space=smem, size = 0x4, offset = 0x4, fixed_abs, tag = 'smem constant byte address 0x4 - core index']
  #allocation1 [shape = 'u32[144,128]{1,0:T(1,128)}', space=vmem, size = 0x12000, scoped, tag = 'internal scratch']
  %s0 = inlined_call_operand.vmem [shape: f32[16,128], index: 0, kind: input, shape index: {}]
  %s1 = inlined_call_operand.vmem [shape: f32[1,128], index: 1, kind: input, shape index: {}]
  %s2 = inlined_call_operand.vmem [shape: f32[1,128], index: 2, kind: input, shape index: {}]
  %s3 = inlined_call_operand.vmem [shape: f32[1,128], index: 3, kind: input, shape index: {}]
  %s4 = inlined_call_operand.vmem [shape: f32[1,128], index: 4, kind: input, shape index: {}]
  %s5 = inlined_call_operand.vmem [shape: f32[16,128], index: 5, kind: output, shape index: {0}]
  %s6 = inlined_call_operand.vmem [shape: f32[1,128], index: 6, kind: output, shape index: {1}]
  %s7 = inlined_call_operand.vmem [shape: f32[1,128], index: 7, kind: output, shape index: {2}]
  %8 = xla_tuple %s5, %s6, %s7
  %s9 = sld [smem:[#allocation0]]
  $region46: #{multi_head_batch_norm.1} parent=0
    _
  %s11 = ssub.s32 1, %s9
  %s12 = scalar_select 0, %s11, %s9
  // Predicated region
  $region2: #{multi_head_batch_norm.1} parent=0 // pred_check
    _
  $region3: #{multi_head_batch_norm.1} parent=0 // pred_check_branch
    %14 = sbr.rel (0) target = $region5
  $region4: #{multi_head_batch_norm.1} parent=0 // pred_region
    _
  $region5: #{multi_head_batch_norm.1} parent=0 // pred_fallthru
    _
  // Predicated region
  $region6: #{multi_head_batch_norm.1} parent=0 // pred_check
    _
  $region7: #{multi_head_batch_norm.1} parent=0 // pred_check_branch
    %16 = sbr.rel (0) target = $region9
  $region8: #{multi_head_batch_norm.1} parent=0 // pred_region
    _
  $region9: #{multi_head_batch_norm.1} parent=0 // pred_fallthru
    _
  // Predicated region
  $region10: #{multi_head_batch_norm.1} parent=0 // pred_check
    _
  $region11: #{multi_head_batch_norm.1} parent=0 // pred_check_branch
    %18 = sbr.rel (0) target = $region13
  $region12: #{multi_head_batch_norm.1} parent=0 // pred_region
    _
  $region13: #{multi_head_batch_norm.1} parent=0 // pred_fallthru
    _
  // Predicated region
  $region14: #{multi_head_batch_norm.1} parent=0 // pred_check
    _
  $region15: #{multi_head_batch_norm.1} parent=0 // pred_check_branch
    %20 = sbr.rel (0) target = $region17
  $region16: #{multi_head_batch_norm.1} parent=0 // pred_region
    _
  $region17: #{multi_head_batch_norm.1} parent=0 // pred_fallthru
    _
  // Predicated region
  $region18: #{multi_head_batch_norm.1} parent=0 // pred_check
    _
  $region19: #{multi_head_batch_norm.1} parent=0 // pred_check_branch
    %22 = sbr.rel (0) target = $region21
  $region20: #{multi_head_batch_norm.1} parent=0 // pred_region
    _
  $region21: #{multi_head_batch_norm.1} parent=0 // pred_fallthru
    _
  %v23 = vld [vmem:[%s0] sm:$0xff]
  %v24 = vld [vmem:[%s0 + $0x8] sm:$0xff]
  %v25 = vadd.f32 %v23, %v24
  %v26 = vrot.slane %v25, 4
  %v27 = vadd.f32 %v25, %v26
  %v28 = vrot.slane %v27, 2
  %v29 = vadd.f32 %v27, %v28
  %v30 = vrot.slane %v29, 1
  %v31 = vadd.f32 %v29, %v30
  %v32 = vmul.f32 %v31, 0.0625
  %v33 = vmul.f32 %v23, %v23
  %v34 = vmul.f32 %v24, %v24
  %v35 = vadd.f32 %v33, %v34
  %v36 = vrot.slane %v35, 4
  %v37 = vadd.f32 %v35, %v36
  %v38 = vrot.slane %v37, 2
  %v39 = vadd.f32 %v37, %v38
  %v40 = vrot.slane %v39, 1
  %v41 = vadd.f32 %v39, %v40
  %v42 = vmul.f32 %v41, 0.0625
  %v43 = vmul.f32 %v32, %v32
  %v44 = vsub.f32 %v42, %v43
  %v45 = vmax.f32 %v44, 0.0
  %v46 = vadd.f32 %v45, 1e-05
  %v47 = vrsqrt.pop %v46
  %v48 = vld [vmem:[%s1] sm:$0x1]
  %v49 = vmul.f32 %v47, %v48
  %v50 = vld [vmem:[%s2] sm:$0x1]
  %v51 = vmul.f32 %v32, %v49
  %v52 = vsub.f32 %v50, %v51
  %v53 = vlaneseq
  %v54 = vshrl.u32 %v53, 7
  %v55 = vsub.s32 0, %v54
  %v56 = vrot.slane %v49, %v55
  %v57 = vmul.f32 %v23, %v56
  %v58 = vmul.f32 %v24, %v56
  %v60 = vlaneseq
  %v61 = vshrl.u32 %v60, 7
  %v62 = vsub.s32 0, %v61
  %v63 = vrot.slane %v52, %v62
  %v65 = vadd.f32 %v57, %v63
  %v66 = vadd.f32 %v58, %v63
  %67 = vst [vmem:[%s5] sm:$0xff] %v65
  %68 = vst [vmem:[%s5 + $0x8] sm:$0xff] %v66
  %v69 = vld [vmem:[%s3] sm:$0x1]
  %v70 = vmul.f32 %v69, 0.9
  %v71 = vmul.f32 %v32, 0.1
  %v72 = vadd.f32 %v70, %v71
  %73 = vst [vmem:[%s6] sm:$0x1] %v72
  %v74 = vld [vmem:[%s4] sm:$0x1]
  %v75 = vmul.f32 %v74, 0.9
  %v76 = vmul.f32 %v45, 0.1
  %v77 = vadd.f32 %v75, %v76
  %78 = vst [vmem:[%s7] sm:$0x1] %v77
  // Predicated region
  $region22: #{multi_head_batch_norm.1} parent=0 // pred_check
    _
  $region23: #{multi_head_batch_norm.1} parent=0 // pred_check_branch
    %80 = sbr.rel (0) target = $region25
  $region24: #{multi_head_batch_norm.1} parent=0 // pred_region
    _
  $region25: #{multi_head_batch_norm.1} parent=0 // pred_fallthru
    _
  // Predicated region
  $region26: #{multi_head_batch_norm.1} parent=0 // pred_check
    _
  $region27: #{multi_head_batch_norm.1} parent=0 // pred_check_branch
    %82 = sbr.rel (0) target = $region29
  $region28: #{multi_head_batch_norm.1} parent=0 // pred_region
    _
  $region29: #{multi_head_batch_norm.1} parent=0 // pred_fallthru
    _
  // Predicated region
  $region30: #{multi_head_batch_norm.1} parent=0 // pred_check
    _
  $region31: #{multi_head_batch_norm.1} parent=0 // pred_check_branch
    %84 = sbr.rel (0) target = $region33
  $region32: #{multi_head_batch_norm.1} parent=0 // pred_region
    _
  $region33: #{multi_head_batch_norm.1} parent=0 // pred_fallthru
    _
  // Predicated region
  $region34: #{multi_head_batch_norm.1} parent=0 // pred_check
    _
  $region35: #{multi_head_batch_norm.1} parent=0 // pred_check_branch
    %86 = sbr.rel (0) target = $region37
  $region36: #{multi_head_batch_norm.1} parent=0 // pred_region
    _
  $region37: #{multi_head_batch_norm.1} parent=0 // pred_fallthru
    _
  // Predicated region
  $region38: #{multi_head_batch_norm.1} parent=0 // pred_check
    _
  $region39: #{multi_head_batch_norm.1} parent=0 // pred_check_branch
    %88 = sbr.rel (0) target = $region41
  $region40: #{multi_head_batch_norm.1} parent=0 // pred_region
    _
  $region41: #{multi_head_batch_norm.1} parent=0 // pred_fallthru
    _
  // Predicated region
  $region42: #{multi_head_batch_norm.1} parent=0 // pred_check
    _
  $region43: #{multi_head_batch_norm.1} parent=0 // pred_check_branch
    %90 = sbr.rel (0) target = $region45
  $region44: #{multi_head_batch_norm.1} parent=0 // pred_region
    _
  $region45: #{multi_head_batch_norm.1} parent=0 // pred_fallthru
    _

</llo_original>
